<compile_context>
chip_gen: v5e
topology: v5e:2x2
jax: 0.10.0
libtpu: 0.0.40
codegen_flags: <defaults>
</compile_context>

<pallas_src>
import functools

import jax
import jax.numpy as jnp
from jax import lax
from jax.experimental import pallas as pl
from jax.experimental.pallas import tpu as pltpu  # noqa: F401  (kept for tuning hooks)


# ---------------------------------------------------------------------------
# Kernel 1: L2 normalization along the last dim (matches torch: no eps).
# Whole (B, N, D) tensor in one grid step.
# ---------------------------------------------------------------------------
def _l2norm_kernel(x_ref, o_ref):
    x = x_ref[...]                                                # (B, N, D)
    inv = lax.rsqrt(jnp.sum(x * x, axis=-1, keepdims=True))       # EUP rsqrt
    o_ref[...] = x * inv


def l2_normalize(x):
    B, N, D = x.shape
    return pl.pallas_call(
        _l2norm_kernel,
        out_shape=jax.ShapeDtypeStruct((B, N, D), jnp.float32),
        grid=(1,),
        in_specs=[pl.BlockSpec((B, N, D), lambda i: (0, 0, 0))],
        out_specs=pl.BlockSpec((B, N, D), lambda i: (0, 0, 0)),
    )(x)


# ---------------------------------------------------------------------------
# Kernel 2: lapReg1 = f^T (lam * W1 - W) f, batched over B in one grid step.
#   W  = |u u^T| with zero diag, symmetric degree normalization (eps = 1e-4)
#   W1 = (ones - I) with the same normalization -> constant row sums (N-1),
#        so (lam * W1) @ f == lam_c * (colsum(f) - f),
#        with lam_c = lam / (1e-4 + (N-1))  (compile-time scalar).
# ---------------------------------------------------------------------------
def _lapreg_kernel(u_ref, f_ref, o_ref, *, lam_c):
    u = u_ref[...]                                                # (B, N, r)
    f = f_ref[...]                                                # (B, N, K)
    N = u.shape[1]

    # W = |u u^T| per batch, no explicit transpose feeding the MXU.
    W = jnp.abs(jnp.einsum("bnr,bmr->bnm", u, u,
                           preferred_element_type=jnp.float32))   # (B, N, N)

    # fill_diagonal_(0)
    row = lax.broadcasted_iota(jnp.int32, (N, N), 0)
    col = lax.broadcasted_iota(jnp.int32, (N, N), 1)
    off_diag = row != col                                         # (N, N)
    W = jnp.where(off_diag[None], W, 0.0)

    # Symmetric degree normalization; W is symmetric so the lane-direction
    # factor is the column sum (axis=-2) -> no (N,1)->(1,N) XLU transpose.
    d_row = lax.rsqrt(1e-4 + jnp.sum(W, axis=-1, keepdims=True))  # (B, N, 1)
    d_col = lax.rsqrt(1e-4 + jnp.sum(W, axis=-2, keepdims=True))  # (B, 1, N)
    W = W * d_row * d_col

    # (lam*W1 - W) @ f :  lam_c * (J - I) @ f = lam_c * (colsum(f) - f)
    s = jnp.sum(f, axis=-2, keepdims=True)                        # (B, 1, K)
    Wf = jnp.einsum("bnm,bmk->bnk", W, f,
                    preferred_element_type=jnp.float32)           # (B, N, K)
    Mf = lam_c * (s - f) - Wf                                     # (B, N, K)

    # f^T @ Mf without materializing f^T.
    o_ref[...] = jnp.einsum("bnk,bnl->bkl", f, Mf,
                            preferred_element_type=jnp.float32)   # (B, K, K)


def laplacian_regularizer(u, features, lam):
    B, N, r = u.shape
    K = features.shape[-1]
    lam_c = float(lam) / (1e-4 + (N - 1))
    # TODO(synk): for large N, tile over N rows (accumulate Wf block-wise and
    # never hold the full W) so the N x N buffer fits v7x's smaller scoped VMEM.
    return pl.pallas_call(
        functools.partial(_lapreg_kernel, lam_c=lam_c),
        out_shape=jax.ShapeDtypeStruct((B, K, K), jnp.float32),
        grid=(1,),
        in_specs=[
            pl.BlockSpec((B, N, r), lambda i: (0, 0, 0)),
            pl.BlockSpec((B, N, K), lambda i: (0, 0, 0)),
        ],
        out_specs=pl.BlockSpec((B, K, K), lambda i: (0, 0, 0)),
    )(u, features)


# ---------------------------------------------------------------------------
# Kernel 3: normed = f @ v1_k, optionally L2-normalized along the last dim.
# Whole batch in one grid step (batched einsum).
# ---------------------------------------------------------------------------
def _project_kernel(f_ref, v_ref, o_ref, *, normalize):
    f = f_ref[...]                                                # (B, N, K)
    v = v_ref[...]                                                # (B, K, k_eff)
    y = jnp.einsum("bnk,bkm->bnm", f, v, preferred_element_type=jnp.float32)
    if normalize:
        y = y * lax.rsqrt(jnp.sum(y * y, axis=-1, keepdims=True))
    o_ref[...] = y


def project_and_normalize(features, v1_k, normalize):
    B, N, K = features.shape
    k_eff = v1_k.shape[-1]
    # Note: output last dim (k_eff <= 16 here) is < 128 lanes, so stores are
    # masked; unavoidable at these problem sizes without padding the output.
    return pl.pallas_call(
        functools.partial(_project_kernel, normalize=normalize),
        out_shape=jax.ShapeDtypeStruct((B, N, k_eff), jnp.float32),
        grid=(1,),
        in_specs=[
            pl.BlockSpec((B, N, K), lambda i: (0, 0, 0)),
            pl.BlockSpec((B, K, k_eff), lambda i: (0, 0, 0)),
        ],
        out_specs=pl.BlockSpec((B, N, k_eff), lambda i: (0, 0, 0)),
    )(features, v1_k)


# ---------------------------------------------------------------------------
# EASE forward (module has no learned parameters; k/lam/low_rank are hparams).
# ---------------------------------------------------------------------------
def ease_forward(features, *, k=40, lam=100.0, low_rank=5, l2_normalize_outputs=True):
    features = features.astype(jnp.float32)

    # 1) L2 normalize each (b, n, :) row  — Pallas kernel.
    features = l2_normalize(features)

    # 2) QR reduction: R of qr(features^T), transposed back.
    #    TODO(synk): no Pallas equivalent for QR; done with jnp.linalg.qr.
    _, r = jnp.linalg.qr(jnp.transpose(features, (0, 2, 1)), mode="reduced")
    features = jnp.transpose(r, (0, 2, 1))                        # (B, N, K), K = min(D, N)

    # 3) SVD, keep top `low_rank` left singular vectors (u u^T is sign-invariant).
    #    TODO(synk): no Pallas equivalent for SVD; done with jnp.linalg.svd.
    u, _, _ = jnp.linalg.svd(features, full_matrices=False)
    u = u[:, :, :low_rank]                                        # (B, N, low_rank)

    # 4) lapReg1 = f^T (lam*W1 - W) f  — Pallas kernel (matmuls + elementwise).
    lapreg = laplacian_regularizer(u, features, lam)              # (B, K, K)

    # 5) Symmetric eigendecomposition (ascending order, same as torch.linalg.eigh,
    #    so taking the first k columns matches the reference).
    #    TODO(synk): no Pallas equivalent for eigh; done with jnp.linalg.eigh.
    _, v1 = jnp.linalg.eigh(lapreg)
    k_eff = min(k, v1.shape[-1])
    v1_k = v1[:, :, :k_eff]                                       # (B, K, k_eff)

    # 6) Projection + optional output L2 normalization — Pallas kernel.
    normed = project_and_normalize(features, v1_k, l2_normalize_outputs)
    return normed                                                 # (B, N, k_eff)


if __name__ == "__main__":
    B, N, D = 2, 16, 32
    key = jax.random.PRNGKey(0)
    features = jax.random.normal(key, (B, N, D), dtype=jnp.float32)

    out = ease_forward(features, k=40, lam=100.0, low_rank=5, l2_normalize_outputs=True)
    out = jax.block_until_ready(out)

    assert out.shape == (B, N, min(40, min(N, D)))
    assert bool(jnp.all(jnp.isfinite(out)))
    print("KERNEL_OK")
</pallas_src>

<mosaic_0001>
module attributes {stable_mosaic.version = 11 : i64} {
  func.func @_l2norm_kernel(%arg0: i32, %arg1: memref<2x16x32xf32, #tpu.memory_space<vmem>>, %arg2: memref<2x16x32xf32, #tpu.memory_space<vmem>>) attributes {dimension_semantics = [#tpu.dimension_semantics<arbitrary>], iteration_bounds = array<i64: 1>, scalar_prefetch = 0 : i64, scratch_operands = 0 : i64, tpu.core_type = #tpu.core_type<tc>, window_params = [{pipeline_mode = #tpu.pipeline_mode<synchronous>, transform_indices = @transform_0, window_bounds = array<i64: 2, 16, 32>}, {pipeline_mode = #tpu.pipeline_mode<synchronous>, transform_indices = @transform_1, window_bounds = array<i64: 2, 16, 32>}]} {
    %c0 = arith.constant 0 : index
    %c0_0 = arith.constant 0 : index
    %c0_1 = arith.constant 0 : index
    %0 = vector.load %arg1[%c0, %c0_0, %c0_1] : memref<2x16x32xf32, #tpu.memory_space<vmem>>, vector<2x16x32xf32>
    %1 = arith.mulf %0, %0 : vector<2x16x32xf32>
    %cst = arith.constant dense<0.000000e+00> : vector<2x16xf32>
    %2 = vector.multi_reduction <add>, %1, %cst [2] : vector<2x16x32xf32> to vector<2x16xf32>
    %3 = vector.shape_cast %2 : vector<2x16xf32> to vector<2x16x1xf32>
    %4 = math.rsqrt %3 : vector<2x16x1xf32>
    %5 = vector.broadcast %4 : vector<2x16x1xf32> to vector<2x16x32xf32>
    %6 = arith.mulf %0, %5 : vector<2x16x32xf32>
    %c0_2 = arith.constant 0 : index
    %c0_3 = arith.constant 0 : index
    %c0_4 = arith.constant 0 : index
    %7 = vector.load %arg2[%c0_2, %c0_3, %c0_4] : memref<2x16x32xf32, #tpu.memory_space<vmem>>, vector<2x16x32xf32>
    tpu.vector_store %arg2[%c0_2, %c0_3, %c0_4], %6 {strides = array<i32>} : memref<2x16x32xf32, #tpu.memory_space<vmem>>, vector<2x16x32xf32>,
    return
  }
  func.func @transform_0(%arg0: i32) -> (i32, i32, i32) {
    %c0_i32 = arith.constant 0 : i32
    %c0_i32_0 = arith.constant 0 : i32
    %c0_i32_1 = arith.constant 0 : i32
    %c0_i32_2 = arith.constant 0 : i32
    return %c0_i32, %c0_i32_0, %c0_i32_1 : i32, i32, i32
  }
  func.func @transform_1(%arg0: i32) -> (i32, i32, i32) {
    %c0_i32 = arith.constant 0 : i32
    %c0_i32_0 = arith.constant 0 : i32
    %c0_i32_1 = arith.constant 0 : i32
    %c0_i32_2 = arith.constant 0 : i32
    return %c0_i32, %c0_i32_0, %c0_i32_1 : i32, i32, i32
  }
}

</mosaic_0001>

<llo_original>
// kernel: tpu_custom_call.1
$region0: #{tpu_custom_call.1}
  #allocation0 [shape = 'u32[]', space=smem, size = 0x4, offset = 0x4, fixed_abs, tag = 'smem constant byte address 0x4 - core index']
  #allocation1 [shape = 'u32[72,128]{1,0:T(1,128)}', space=vmem, size = 0x9000, scoped, tag = 'internal scratch']
  %s0 = inlined_call_operand.hbm [shape: f32[2,16,32], index: 0, kind: input, shape index: {}]
  %s1 = inlined_call_operand.hbm [shape: f32[2,16,32], index: 1, kind: output, shape index: {}]
  %s2 = sld [smem:[#allocation0]]
  $region18: #{tpu_custom_call.1} parent=0
    _
  %s4 = ssub.s32 1, %s2
  %s5 = scalar_select 0, %s4, %s2
  $region1: #{tpu_custom_call.1} parent=0
    #allocation2 [shape = 'u8[16384]{0}', space=vmem, size = 0x4000, scoped, tag = 'input window, operand 0, single buffered']
    #allocation3 [shape = 's32[1]{0}', space=sflag, size = 0x4, scoped, tag = 'scoped memory for tpu_custom_call.1']
    #allocation4 [shape = 's32[1]{0}', space=sflag, size = 0x4, scoped, tag = 'scoped memory for tpu_custom_call.1']
    #allocation5 [shape = 'u8[16384]{0}', space=vmem, size = 0x4000, scoped, tag = 'output window, operand 0, single buffered']
    %6 = vsyncpa [#allocation3], 0
    %7 = vsyncpa [#allocation4], 0
    // Predicated region
    $region2: #{tpu_custom_call.1} parent=1 // pred_check
      _
    $region3: #{tpu_custom_call.1} parent=1 // pred_check_branch
      %9 = sbr.rel (0) target = $region5
    $region4: #{tpu_custom_call.1} parent=1 // pred_region
      %11 = vsyncadd [#allocation3], 0
      %s12 = sshll.u32 %s0, 4
      %s13 = int_to_ptr.hbm [resolvable:$true] %s12
      %s14 = sshll.u32 [#allocation2], 4
      %s15 = int_to_ptr.vmem [resolvable:$true] %s14
      %20 = dma.hbm_to_vmem [thread:$0]  %s13, 512, %s15, [#allocation3], 128, 128, 8
    $region5: #{tpu_custom_call.1} parent=1 // pred_fallthru
      _
    // Predicated region
    $region6: #{tpu_custom_call.1} parent=1 // pred_check
      _
    $region7: #{tpu_custom_call.1} parent=1 // pred_check_branch
      %22 = sbr.rel (0) target = $region9
    $region8: #{tpu_custom_call.1} parent=1 // pred_region
      %24 = dma.done [#allocation3], 512
    $region9: #{tpu_custom_call.1} parent=1 // pred_fallthru
      _
    %v25 = vld [vmem:[#allocation2] sm:$0xff]
    %v26 = vld [vmem:[#allocation2 + $0x8] sm:$0xff]
    %v27 = vld [vmem:[#allocation2 + $0x10] sm:$0xff]
    %v28 = vld [vmem:[#allocation2 + $0x18] sm:$0xff]
    %v29 = vmul.f32 %v25, %v25
    %v30 = vmul.f32 %v26, %v26
    %v31 = vmul.f32 %v27, %v27
    %v32 = vmul.f32 %v28, %v28
    %vm33 = vcmask 261120
    %v34 = vsel %vm33, %v29, 0.0
    %35 = vadd.xlane.f32.xlu0 %v34
    %v36 = vpop.xlane.xlu0 %35
    %v37 = vsel %vm33, %v30, 0.0
    %38 = vadd.xlane.f32.xlu0 %v37
    %v39 = vpop.xlane.xlu0 %38
    %v40 = vsel %vm33, %v31, 0.0
    %41 = vadd.xlane.f32.xlu0 %v40
    %v42 = vpop.xlane.xlu0 %41
    %v43 = vsel %vm33, %v32, 0.0
    %44 = vadd.xlane.f32.xlu0 %v43
    %v45 = vpop.xlane.xlu0 %44
    %v46 = vrsqrt.pop %v36
    %v47 = vmul.f32 %v46, %v36
    %v48 = vmul.f32 %v47, %v46
    %v49 = vmul.f32 0.5, %v48
    %v50 = vsub.f32 1.5, %v49
    %v51 = vmul.f32 %v46, %v50
    %vm52 = vweird.f32 %v36
    %vm53 = vweird.f32 %v46
    %vm54 = vmor %vm52, %vm53
    %v55 = vsel %vm54, %v46, %v51
    %v56 = vrsqrt.pop %v39
    %v57 = vmul.f32 %v56, %v39
    %v58 = vmul.f32 %v57, %v56
    %v59 = vmul.f32 0.5, %v58
    %v60 = vsub.f32 1.5, %v59
    %v61 = vmul.f32 %v56, %v60
    %vm62 = vweird.f32 %v39
    %vm63 = vweird.f32 %v56
    %vm64 = vmor %vm62, %vm63
    %v65 = vsel %vm64, %v56, %v61
    %v66 = vrsqrt.pop %v42
    %v67 = vmul.f32 %v66, %v42
    %v68 = vmul.f32 %v67, %v66
    %v69 = vmul.f32 0.5, %v68
    %v70 = vsub.f32 1.5, %v69
    %v71 = vmul.f32 %v66, %v70
    %vm72 = vweird.f32 %v42
    %vm73 = vweird.f32 %v66
    %vm74 = vmor %vm72, %vm73
    %v75 = vsel %vm74, %v66, %v71
    %v76 = vrsqrt.pop %v45
    %v77 = vmul.f32 %v76, %v45
    %v78 = vmul.f32 %v77, %v76
    %v79 = vmul.f32 0.5, %v78
    %v80 = vsub.f32 1.5, %v79
    %v81 = vmul.f32 %v76, %v80
    %vm82 = vweird.f32 %v45
    %vm83 = vweird.f32 %v76
    %vm84 = vmor %vm82, %vm83
    %v85 = vsel %vm84, %v76, %v81
    %v86 = vmul.f32 %v25, %v55
    %v87 = vmul.f32 %v26, %v65
    %v88 = vmul.f32 %v27, %v75
    %v89 = vmul.f32 %v28, %v85
    %90 = vst.msk [vmem:[#allocation5] sm:$0xff] %vm33, %v86
    %91 = vst.msk [vmem:[#allocation5 + $0x8] sm:$0xff] %vm33, %v87
    %92 = vst.msk [vmem:[#allocation5 + $0x10] sm:$0xff] %vm33, %v88
    %93 = vst.msk [vmem:[#allocation5 + $0x18] sm:$0xff] %vm33, %v89
    // Predicated region
    $region10: #{tpu_custom_call.1} parent=1 // pred_check
      _
    $region11: #{tpu_custom_call.1} parent=1 // pred_check_branch
      %95 = sbr.rel (0) target = $region13
    $region12: #{tpu_custom_call.1} parent=1 // pred_region
      %97 = vsyncadd [#allocation4], 0
      %s98 = sshll.u32 [#allocation5], 4
      %s99 = int_to_ptr.vmem [resolvable:$true] %s98
      %s100 = sshll.u32 %s1, 4
      %s101 = int_to_ptr.hbm [resolvable:$true] %s100
      %106 = dma.vmem_to_hbm [thread:$0]  %s99, 512, %s101, [#allocation4], 128, 128, 8
    $region13: #{tpu_custom_call.1} parent=1 // pred_fallthru
      _
    // Predicated region
    $region14: #{tpu_custom_call.1} parent=1 // pred_check
      _
    $region15: #{tpu_custom_call.1} parent=1 // pred_check_branch
      %108 = sbr.rel (0) target = $region17
    $region16: #{tpu_custom_call.1} parent=1 // pred_region
      %110 = dma.done [#allocation4], 512
    $region17: #{tpu_custom_call.1} parent=1 // pred_fallthru
      _
    %111 = vsyncpa [#allocation3], 1
    %112 = vsyncpa [#allocation4], 1

</llo_original>
